<compile_context>
chip_gen: v7x
topology: tpu7x:2x2x1
jax: 0.10.0
libtpu: 0.0.40
codegen_flags: <defaults>
</compile_context>

<pallas_src>
import functools

import jax
import jax.numpy as jnp
from jax.experimental import pallas as pl
from jax.experimental.pallas import tpu as pltpu


# ----------------------------- small helpers --------------------------------
def _round_up(x, m):
    return ((x + m - 1) // m) * m


def _cdiv(a, b):
    return (a + b - 1) // b


def _largest_divisor_tile(total, unit, cap):
    """Largest multiple of `unit` that divides `total` (a multiple of unit) and is <= cap."""
    n = total // unit
    best = 1
    d = 1
    while d * d <= n:
        if n % d == 0:
            for cand in (d, n // d):
                if cand * unit <= cap:
                    best = max(best, cand)
        d += 1
    return best * unit


def _vmem_capacity_bytes():
    try:
        return int(pltpu.get_tpu_info().vmem_capacity_bytes)
    except Exception:
        return 64 * 1024 * 1024  # conservative default (v7x per-TC VMEM)


# ------------------------------- kernels -------------------------------------
def _linear_relu_kernel_single(x_ref, w_ref, b_ref, o_ref):
    # Single K step: no accumulator scratch, write result directly.
    y = jnp.dot(x_ref[...], w_ref[...], preferred_element_type=jnp.float32)
    o_ref[...] = jnp.maximum(y + b_ref[...], 0.0).astype(o_ref.dtype)


def _linear_relu_kernel_multi(x_ref, w_ref, b_ref, o_ref, acc_ref):
    # x_ref: (tm, tk)  w_ref: (tk, tn)  b_ref: (1, tn)
    # o_ref: (tm, tn)  acc_ref: (tm, tn) f32 scratch, resident across the K axis.
    k = pl.program_id(2)
    partial = jnp.dot(x_ref[...], w_ref[...], preferred_element_type=jnp.float32)

    @pl.when(k == 0)
    def _():
        acc_ref[...] = partial          # no separate zero-init store

    @pl.when(k != 0)
    def _():
        acc_ref[...] = acc_ref[...] + partial

    @pl.when(k == pl.num_programs(2) - 1)
    def _():
        y = acc_ref[...] + b_ref[...]   # bias broadcast over rows
        o_ref[...] = jnp.maximum(y, 0.0).astype(o_ref.dtype)


# ------------------------------- wrapper --------------------------------------
@functools.partial(jax.jit, static_argnames=("compute_dtype",))
def cluster_forward(x, w, b, *, compute_dtype=None):
    """relu(x @ w + b) via a tiled Pallas TPU kernel.

    x: (..., K)  w: (K, N) (transposed vs. PyTorch's (N, K))  b: (N,)
    compute_dtype: optional dtype (e.g. jnp.bfloat16) for the x/w operands;
                   accumulation stays f32.  Default matches x.dtype (f32).
    """
    *lead, K = x.shape
    B = 1
    for d in lead:
        B *= d
    x2d = x.reshape(B, K)
    Kw, N = w.shape
    assert Kw == K and b.shape == (N,)

    out_dtype = x.dtype
    cdt = jnp.dtype(compute_dtype) if compute_dtype is not None else jnp.dtype(x.dtype)
    row_align = max(8, 32 // cdt.itemsize)          # 8 f32, 16 bf16, 32 int8/fp8

    # ---- Generation-aware caps & VMEM budget -------------------------------
    vmem_cap = _vmem_capacity_bytes()
    big_vmem = vmem_cap >= 100 * 1024 * 1024        # v5e / v6e (128 MiB)
    cap_m, cap_n, cap_k = (512, 1024, 1024) if big_vmem else (256, 512, 512)
    hard_cap_k = 2 * cap_k                          # allow one fat K tile

    # ---- Divisor-aware tile selection (minimal padding) --------------------
    Np0 = _round_up(N, 128)
    Kp0 = _round_up(K, 128)

    tn = Np0 if Np0 <= cap_n else _largest_divisor_tile(Np0, 128, cap_n)
    Np = _round_up(Np0, tn)

    if Kp0 <= hard_cap_k:
        tk = Kp0                                    # single K step, no re-pad
    else:
        tk = _largest_divisor_tile(Kp0, 128, cap_k)
    Kp = _round_up(Kp0, tk)

    n_m_tiles = _cdiv(B, cap_m)
    # On 2-TensorCore / small-VMEM parts keep >=2 parallel tiles for large
    # problems so the "parallel" grid axes can actually shard across cores.
    if (not big_vmem) and n_m_tiles * (Np // tn) == 1 \
            and B >= 2 * row_align and B * Kp * Np >= (4 << 20):
        n_m_tiles = 2
    tm = _round_up(_cdiv(B, n_m_tiles), row_align)
    Mp = _round_up(B, tm)

    grid_m, grid_n, grid_k = Mp // tm, Np // tn, Kp // tk

    # ---- Pad operands only when needed (zero padding is exact) -------------
    xp = x2d
    if (Mp, Kp) != (B, K):
        xp = jnp.pad(xp, ((0, Mp - B), (0, Kp - K)))
    if xp.dtype != cdt:
        xp = xp.astype(cdt)

    wp = w
    if (Kp, Np) != (K, N):
        wp = jnp.pad(wp, ((0, Kp - K), (0, Np - N)))
    if wp.dtype != cdt:
        wp = wp.astype(cdt)

    bp = b if Np == N else jnp.pad(b, (0, Np - N))
    bp = bp.reshape(1, Np).astype(jnp.float32)

    # ---- VMEM limit: double-buffered tiles + accumulator, with headroom ----
    in_item = cdt.itemsize
    out_item = jnp.dtype(out_dtype).itemsize
    tile_bytes = (
        2 * tm * tk * in_item            # x tiles (double-buffered)
        + 2 * tk * tn * in_item          # w tiles
        + 2 * tn * 4                     # bias tiles
        + 2 * tm * tn * out_item         # output tiles
        + (tm * tn * 4 if grid_k > 1 else 0)   # f32 accumulator scratch
    )
    vmem_limit = int(min(max(int(1.5 * tile_bytes), 8 * 1024 * 1024),
                         int(0.6 * vmem_cap)))

    cost = pl.CostEstimate(
        flops=2 * Mp * Np * Kp,
        transcendentals=0,
        bytes_accessed=(
            grid_n * Mp * Kp * in_item       # x re-read per N tile
            + grid_m * Kp * Np * in_item     # w re-read per M tile
            + Np * 4
            + Mp * Np * out_item
        ),
    )

    if grid_k == 1:
        out_p = pl.pallas_call(
            _linear_relu_kernel_single,
            out_shape=jax.ShapeDtypeStruct((Mp, Np), out_dtype),
            grid_spec=pltpu.PrefetchScalarGridSpec(
                num_scalar_prefetch=0,
                grid=(grid_m, grid_n),
                in_specs=[
                    pl.BlockSpec((tm, Kp), lambda i, j: (i, 0)),   # x tile
                    pl.BlockSpec((Kp, tn), lambda i, j: (0, j)),   # w tile
                    pl.BlockSpec((1, tn), lambda i, j: (0, j)),    # bias tile
                ],
                out_specs=pl.BlockSpec((tm, tn), lambda i, j: (i, j)),
            ),
            compiler_params=pltpu.CompilerParams(
                dimension_semantics=("parallel", "parallel"),
                vmem_limit_bytes=vmem_limit,
            ),
            cost_estimate=cost,
        )(xp, wp, bp)
    else:
        out_p = pl.pallas_call(
            _linear_relu_kernel_multi,
            out_shape=jax.ShapeDtypeStruct((Mp, Np), out_dtype),
            grid_spec=pltpu.PrefetchScalarGridSpec(
                num_scalar_prefetch=0,
                grid=(grid_m, grid_n, grid_k),
                in_specs=[
                    pl.BlockSpec((tm, tk), lambda i, j, k: (i, k)),   # x tile
                    pl.BlockSpec((tk, tn), lambda i, j, k: (k, j)),   # w tile
                    pl.BlockSpec((1, tn), lambda i, j, k: (0, j)),    # bias tile
                ],
                out_specs=pl.BlockSpec((tm, tn), lambda i, j, k: (i, j)),
                scratch_shapes=[pltpu.VMEM((tm, tn), jnp.float32)],
            ),
            compiler_params=pltpu.CompilerParams(
                dimension_semantics=("parallel", "parallel", "arbitrary"),
                vmem_limit_bytes=vmem_limit,
            ),
            cost_estimate=cost,
        )(xp, wp, bp)

    out = out_p if (Mp, Np) == (B, N) else out_p[:B, :N]
    return out.reshape(*lead, N) if lead else out.reshape(N)


if __name__ == "__main__":
    key = jax.random.PRNGKey(0)

    # ---- Small shapes consistent with the module: nn.Linear(32, 64) --------
    batch, in_features, out_features = 8, 32, 64
    kx, kw, kb, k2 = jax.random.split(key, 4)

    x = jax.random.normal(kx, (batch, in_features), dtype=jnp.float32)
    bound = 1.0 / jnp.sqrt(jnp.float32(in_features))
    w = jax.random.uniform(kw, (in_features, out_features), jnp.float32,
                           minval=-bound, maxval=bound)
    b = jax.random.uniform(kb, (out_features,), jnp.float32,
                           minval=-bound, maxval=bound)

    out = jax.block_until_ready(cluster_forward(x, w, b))
    ref = jnp.maximum(x @ w + b, 0.0)
    assert out.shape == (batch, out_features)
    assert jnp.allclose(out, ref, atol=1e-5, rtol=1e-5)

    # ---- Larger non-power-of-two shape (exercises divisor-aware tiling) ----
    B2, K2, N2 = 300, 640, 384
    k2x, k2w, k2b = jax.random.split(k2, 3)
    x2 = jax.random.normal(k2x, (B2, K2), dtype=jnp.float32)
    w2 = jax.random.normal(k2w, (K2, N2), dtype=jnp.float32) * 0.05
    b2 = jax.random.normal(k2b, (N2,), dtype=jnp.float32)

    out2 = jax.block_until_ready(cluster_forward(x2, w2, b2))
    ref2 = jnp.maximum(x2 @ w2 + b2, 0.0)
    assert out2.shape == (B2, N2)
    assert jnp.allclose(out2, ref2, atol=1e-2, rtol=1e-2)

    # ---- Even larger shape to exercise the multi-K accumulator path --------
    B3, K3, N3 = 384, 4096, 1536
    k3x, k3w, k3b = jax.random.split(jax.random.PRNGKey(1), 3)
    x3 = jax.random.normal(k3x, (B3, K3), dtype=jnp.float32) * 0.1
    w3 = jax.random.normal(k3w, (K3, N3), dtype=jnp.float32) * 0.02
    b3 = jax.random.normal(k3b, (N3,), dtype=jnp.float32)

    out3 = jax.block_until_ready(cluster_forward(x3, w3, b3))
    ref3 = jnp.maximum(x3 @ w3 + b3, 0.0)
    assert out3.shape == (B3, N3)
    assert jnp.allclose(out3, ref3, atol=1e-2, rtol=1e-2)

    print("KERNEL_OK")
</pallas_src>

<mosaic_0001>
module attributes {stable_mosaic.version = 11 : i64} {
  func.func @_linear_relu_kernel_single(%arg0: i32, %arg1: i32, %arg2: memref<8x128xf32, #tpu.memory_space<vmem>>, %arg3: memref<128x128xf32, #tpu.memory_space<vmem>>, %arg4: memref<1x128xf32, #tpu.memory_space<vmem>>, %arg5: memref<8x128xf32, #tpu.memory_space<vmem>>) attributes {dimension_semantics = [#tpu.dimension_semantics<parallel>, #tpu.dimension_semantics<parallel>], iteration_bounds = array<i64: 1, 1>, scalar_prefetch = 0 : i64, scratch_operands = 0 : i64, tpu.core_type = #tpu.core_type<tc>, window_params = [{transform_indices = @transform_0, window_bounds = array<i64: 8, 128>}, {transform_indices = @transform_1, window_bounds = array<i64: 128, 128>}, {transform_indices = @transform_2, window_bounds = array<i64: 1, 128>}, {transform_indices = @transform_3, window_bounds = array<i64: 8, 128>}]} {
    %c0 = arith.constant 0 : index
    %c0_0 = arith.constant 0 : index
    %0 = vector.load %arg2[%c0, %c0_0] : memref<8x128xf32, #tpu.memory_space<vmem>>, vector<8x128xf32>
    %c0_1 = arith.constant 0 : index
    %c0_2 = arith.constant 0 : index
    %1 = vector.load %arg3[%c0_1, %c0_2] : memref<128x128xf32, #tpu.memory_space<vmem>>, vector<128x128xf32>
    %cst = arith.constant dense<0.000000e+00> : vector<8x128xf32>
    %2 = tpu.matmul %0, %1, %cst {dimension_numbers = #tpu.dot_dimension_numbers<[1], [0], [0], [1], [0, 0, 1, 1], [], []>} : vector<8x128xf32>, vector<128x128xf32>, vector<8x128xf32> -> vector<8x128xf32>
    %c0_3 = arith.constant 0 : index
    %c0_4 = arith.constant 0 : index
    %3 = vector.load %arg4[%c0_3, %c0_4] : memref<1x128xf32, #tpu.memory_space<vmem>>, vector<1x128xf32>
    %4 = vector.broadcast %3 : vector<1x128xf32> to vector<8x128xf32>
    %5 = arith.addf %2, %4 : vector<8x128xf32>
    %cst_5 = arith.constant 0.000000e+00 : f32
    %6 = vector.broadcast %cst_5 : f32 to vector<8x128xf32>
    %7 = arith.maximumf %5, %6 : vector<8x128xf32>
    %c0_6 = arith.constant 0 : index
    %c0_7 = arith.constant 0 : index
    %8 = vector.load %arg5[%c0_6, %c0_7] : memref<8x128xf32, #tpu.memory_space<vmem>>, vector<8x128xf32>
    tpu.vector_store %arg5[%c0_6, %c0_7], %7 {strides = array<i32>} : memref<8x128xf32, #tpu.memory_space<vmem>>, vector<8x128xf32>,
    return
  }
  func.func @transform_0(%arg0: i32, %arg1: i32) -> (i32, i32) {
    %c0_i32 = arith.constant 0 : i32
    %c0_i32_0 = arith.constant 0 : i32
    return %arg0, %c0_i32 : i32, i32
  }
  func.func @transform_1(%arg0: i32, %arg1: i32) -> (i32, i32) {
    %c0_i32 = arith.constant 0 : i32
    %c0_i32_0 = arith.constant 0 : i32
    return %c0_i32, %arg1 : i32, i32
  }
  func.func @transform_2(%arg0: i32, %arg1: i32) -> (i32, i32) {
    %c0_i32 = arith.constant 0 : i32
    %c0_i32_0 = arith.constant 0 : i32
    return %c0_i32, %arg1 : i32, i32
  }
  func.func @transform_3(%arg0: i32, %arg1: i32) -> (i32, i32) {
    %c0_i32 = arith.constant 0 : i32
    return %arg0, %arg1 : i32, i32
  }
}

</mosaic_0001>

<llo_original>
// kernel: cluster_forward.1
$region0: #{cluster_forward.1}
  #allocation0 [shape = 'u32[]', space=smem, size = 0x4, offset = 0x4, fixed_abs, tag = 'smem constant byte address 0x4 - core index']
  #allocation1 [shape = 'u32[144,128]{1,0:T(1,128)}', space=vmem, size = 0x12000, scoped, tag = 'internal scratch']
  %s0 = inlined_call_operand.vmem [shape: f32[8,128], index: 0, kind: input, shape index: {}]
  %s1 = inlined_call_operand.vmem [shape: f32[128,128], index: 1, kind: input, shape index: {}]
  %s2 = inlined_call_operand.vmem [shape: f32[1,128], index: 2, kind: input, shape index: {}]
  %s3 = inlined_call_operand.hbm [shape: f32[8,128], index: 3, kind: output, shape index: {}]
  %s4 = sld [smem:[#allocation0]]
  $region22: #{cluster_forward.1} parent=0
    _
  %s6 = ssub.s32 1, %s4
  %s7 = scalar_select 0, %s6, %s4
  $region1: #{cluster_forward.1} parent=0
    #allocation2 [shape = 'u8[4096]{0}', space=vmem, size = 0x1000, scoped, tag = 'output window, operand 0, single buffered']
    #allocation3 [shape = 's32[1]{0}', space=sflag, size = 0x4, scoped, tag = 'scoped memory for cluster_forward.1']
    %8 = vsyncpa [#allocation3], 0
    // Predicated region
    $region2: #{cluster_forward.1} parent=1 // pred_check
      _
    $region3: #{cluster_forward.1} parent=1 // pred_check_branch
      %10 = sbr.rel (0) target = $region5
    $region4: #{cluster_forward.1} parent=1 // pred_region
      _
    $region5: #{cluster_forward.1} parent=1 // pred_fallthru
      _
    // Predicated region
    $region6: #{cluster_forward.1} parent=1 // pred_check
      _
    $region7: #{cluster_forward.1} parent=1 // pred_check_branch
      %12 = sbr.rel (0) target = $region9
    $region8: #{cluster_forward.1} parent=1 // pred_region
      _
    $region9: #{cluster_forward.1} parent=1 // pred_fallthru
      _
    // Predicated region
    $region10: #{cluster_forward.1} parent=1 // pred_check
      _
    $region11: #{cluster_forward.1} parent=1 // pred_check_branch
      %14 = sbr.rel (0) target = $region13
    $region12: #{cluster_forward.1} parent=1 // pred_region
      _
    $region13: #{cluster_forward.1} parent=1 // pred_fallthru
      _
    %v15 = vld [vmem:[%s0] sm:$0xff]
    %v16 = vld [vmem:[%s1] sm:$0xff]
    %v17 = vld [vmem:[%s1 + $0x8] sm:$0xff]
    %v18 = vld [vmem:[%s1 + $0x10] sm:$0xff]
    %v19 = vld [vmem:[%s1 + $0x18] sm:$0xff]
    %v20 = vld [vmem:[%s1 + $0x20] sm:$0xff]
    %v21 = vld [vmem:[%s1 + $0x28] sm:$0xff]
    %v22 = vld [vmem:[%s1 + $0x30] sm:$0xff]
    %v23 = vld [vmem:[%s1 + $0x38] sm:$0xff]
    %v24 = vld [vmem:[%s1 + $0x40] sm:$0xff]
    %v25 = vld [vmem:[%s1 + $0x48] sm:$0xff]
    %v26 = vld [vmem:[%s1 + $0x50] sm:$0xff]
    %v27 = vld [vmem:[%s1 + $0x58] sm:$0xff]
    %v28 = vld [vmem:[%s1 + $0x60] sm:$0xff]
    %v29 = vld [vmem:[%s1 + $0x68] sm:$0xff]
    %v30 = vld [vmem:[%s1 + $0x70] sm:$0xff]
    %v31 = vld [vmem:[%s1 + $0x78] sm:$0xff]
    %v32 = vld [vmem:[%s2] sm:$0x1]
    %v34 = vlaneseq
    %v35 = vshrl.u32 %v34, 7
    %v36 = vsub.s32 0, %v35
    %v37 = vrot.slane %v32, %v36
    %39 = vmatprep.subr.mxu0 0.0
    %40 = vmatpush1.msra.mxu0 %v16
    %41 = vmatprep.subr.mxu0 0.0
    %42 = vmatpush1.msra.mxu0 %v17
    %43 = vmatprep.subr.mxu0 0.0
    %44 = vmatpush1.msra.mxu0 %v18
    %45 = vmatprep.subr.mxu0 0.0
    %46 = vmatpush1.msra.mxu0 %v19
    %47 = vmatprep.subr.mxu0 0.0
    %48 = vmatpush1.msra.mxu0 %v20
    %49 = vmatprep.subr.mxu0 0.0
    %50 = vmatpush1.msra.mxu0 %v21
    %51 = vmatprep.subr.mxu0 0.0
    %52 = vmatpush1.msra.mxu0 %v22
    %53 = vmatprep.subr.mxu0 0.0
    %54 = vmatpush1.msra.mxu0 %v23
    %55 = vmatprep.subr.mxu0 0.0
    %56 = vmatpush1.msra.mxu0 %v24
    %57 = vmatprep.subr.mxu0 0.0
    %58 = vmatpush1.msra.mxu0 %v25
    %59 = vmatprep.subr.mxu0 0.0
    %60 = vmatpush1.msra.mxu0 %v26
    %61 = vmatprep.subr.mxu0 0.0
    %62 = vmatpush1.msra.mxu0 %v27
    %63 = vmatprep.subr.mxu0 0.0
    %64 = vmatpush1.msra.mxu0 %v28
    %65 = vmatprep.subr.mxu0 0.0
    %66 = vmatpush1.msra.mxu0 %v29
    %67 = vmatprep.subr.mxu0 0.0
    %68 = vmatpush1.msra.mxu0 %v30
    %69 = vmatprep.subr.mxu0 0.0
    %70 = vmatpush1.msra.mxu0 %v31
    %71 = vmatprep.subr.mxu0 0.0
    %72 = vmatpush1.msra.mxu0 0.0
    %73 = vmatprep.subr.mxu0 0.0
    %74 = vmatpush1.msra.mxu0 0.0
    %75 = vmatprep.subr.mxu0 0.0
    %76 = vmatpush1.msra.mxu0 0.0
    %77 = vmatprep.subr.mxu0 0.0
    %78 = vmatpush1.msra.mxu0 0.0
    %79 = vmatprep.subr.mxu0 0.0
    %80 = vmatpush1.msra.mxu0 0.0
    %81 = vmatprep.subr.mxu0 0.0
    %82 = vmatpush1.msra.mxu0 0.0
    %83 = vmatprep.subr.mxu0 0.0
    %84 = vmatpush1.msra.mxu0 0.0
    %85 = vmatprep.subr.mxu0 0.0
    %86 = vmatpush1.msra.mxu0 0.0
    %87 = vmatprep.subr.mxu0 0.0
    %88 = vmatpush1.msra.mxu0 0.0
    %89 = vmatprep.subr.mxu0 0.0
    %90 = vmatpush1.msra.mxu0 0.0
    %91 = vmatprep.subr.mxu0 0.0
    %92 = vmatpush1.msra.mxu0 0.0
    %93 = vmatprep.subr.mxu0 0.0
    %94 = vmatpush1.msra.mxu0 0.0
    %95 = vmatprep.subr.mxu0 0.0
    %96 = vmatpush1.msra.mxu0 0.0
    %97 = vmatprep.subr.mxu0 0.0
    %98 = vmatpush1.msra.mxu0 0.0
    %99 = vmatprep.subr.mxu0 0.0
    %100 = vmatpush1.msra.mxu0 0.0
    %101 = vmatprep.subr.mxu0 0.0
    %102 = vmatpush1.msra.mxu0 0.0
    %103 = vmatprep.mubr.f32.mxu0 0.0
    %104 = vmatmul.mubr.f32.gmra.mrb[0].mxu0 %v15
    %v105 = vpop.f32.mrb[0].mxu0
    %v106 = vadd.f32 %v37, %v105
    %v107 = vpop.f32.mrb[0].mxu0
    %108 = vdwg.mxu0
    %v109 = vmax.f32 %v106, 0.0
    %110 = vst [vmem:[#allocation2] sm:$0xff] %v109
    // Predicated region
    $region14: #{cluster_forward.1} parent=1 // pred_check
      _
    $region15: #{cluster_forward.1} parent=1 // pred_check_branch
      %112 = sbr.rel (0) target = $region17
    $region16: #{cluster_forward.1} parent=1 // pred_region
      %s114 = ssub.s32 128, 128
      %115 = vsyncadd [#allocation3], %s114
      %s117 = sshll.u32 [#allocation2], 4
      %s118 = int_to_ptr.vmem [resolvable:$true] %s117
      %120 = dma.vmem_to_hbm [thread:$0]  %s118, 128, %s3, [#allocation3]
    $region17: #{cluster_forward.1} parent=1 // pred_fallthru
      _
    // Predicated region
    $region18: #{cluster_forward.1} parent=1 // pred_check
      _
    $region19: #{cluster_forward.1} parent=1 // pred_check_branch
      %122 = sbr.rel (0) target = $region21
    $region20: #{cluster_forward.1} parent=1 // pred_region
      %123 = dma.done [#allocation3], 128
    $region21: #{cluster_forward.1} parent=1 // pred_fallthru
      _
    %124 = vsyncpa [#allocation3], 1

</llo_original>
